<compile_context>
chip_gen: v6e
topology: v6e:2x2x1
jax: 0.10.0
libtpu: 0.0.40
codegen_flags: <defaults>
</compile_context>

<pallas_src>
import functools

import jax
import jax.numpy as jnp
from jax.experimental import pallas as pl
from jax.experimental.pallas import tpu as pltpu


def _patch_embed_kernel(x_ref, w_ref, b_ref, o_ref):
    # x_ref: (TM, K) patches, w_ref: (K, E), b_ref: (1, E) f32, o_ref: (TM, E)
    acc = jnp.dot(x_ref[...], w_ref[...], preferred_element_type=jnp.float32)
    o_ref[...] = (acc + b_ref[...]).astype(o_ref.dtype)


@functools.partial(jax.jit, static_argnames=("patch_size", "tile_m", "use_bf16"))
def patch_embedding(x, weight, bias, patch_size, *, tile_m=512, use_bf16=True):
    """x: [B, C, H, W] (NCHW), weight: [E, C, P, P], bias: [E] -> [B, N, E]."""
    B, C, H, W = x.shape
    E = weight.shape[0]
    P = patch_size
    assert H % P == 0 and W % P == 0
    Hn, Wn = H // P, W // P
    N = Hn * Wn
    K = C * P * P
    M = B * N

    # Unfold into non-overlapping patches, ordered (c, kh, kw) to match the
    # Conv2d OIHW weight layout.
    patches = x.reshape(B, C, Hn, P, Wn, P)
    patches = jnp.transpose(patches, (0, 2, 4, 1, 3, 5)).reshape(M, K)

    w_mat = weight.reshape(E, K).T                    # [K, E]
    b_row = bias.reshape(1, E).astype(jnp.float32)    # [1, E] f32 (added in f32)

    if use_bf16:
        patches = patches.astype(jnp.bfloat16)
        w_mat = w_mat.astype(jnp.bfloat16)

    # Tile M; keep the weight resident across all M tiles.
    if M >= tile_m:
        tm = tile_m
    else:
        tm = ((M + 7) // 8) * 8                       # sublane-aligned small case
    Mp = pl.cdiv(M, tm) * tm
    if Mp != M:
        patches = jnp.pad(patches, ((0, Mp - M), (0, 0)))

    grid = (Mp // tm,)

    itemsize_in = patches.dtype.itemsize
    cost = pl.CostEstimate(
        flops=2 * Mp * K * E,
        transcendentals=0,
        bytes_accessed=(Mp * K * itemsize_in            # patches read
                        + K * E * itemsize_in           # weight read (once)
                        + Mp * E * x.dtype.itemsize),   # output write
    )

    out = pl.pallas_call(
        _patch_embed_kernel,
        out_shape=jax.ShapeDtypeStruct((Mp, E), x.dtype),
        grid_spec=pltpu.PrefetchScalarGridSpec(
            num_scalar_prefetch=0,
            grid=grid,
            in_specs=[
                pl.BlockSpec((tm, K), lambda i: (i, 0)),   # streamed over M
                pl.BlockSpec((K, E), lambda i: (0, 0)),    # VMEM-resident weight
                pl.BlockSpec((1, E), lambda i: (0, 0)),    # VMEM-resident bias
            ],
            out_specs=pl.BlockSpec((tm, E), lambda i: (i, 0)),
        ),
        compiler_params=pltpu.CompilerParams(
            dimension_semantics=("parallel",),             # megacore on v7x
            allow_input_fusion=[True, False, False],       # fuse unfold into input
        ),
        cost_estimate=cost,
    )(patches, w_mat, b_row)

    if Mp != M:
        out = out[:M]
    return out.reshape(B, N, E)


if __name__ == "__main__":
    # Small shapes consistent with the module: Conv2d(3 -> embed_dim, k=P, s=P)
    B, C, H, W = 2, 3, 16, 16
    P = 4
    E = 32

    key = jax.random.PRNGKey(0)
    kx, kw, kb = jax.random.split(key, 3)
    x = jax.random.normal(kx, (B, C, H, W), dtype=jnp.float32)
    weight = jax.random.normal(kw, (E, C, P, P), dtype=jnp.float32) * 0.02
    bias = jax.random.normal(kb, (E,), dtype=jnp.float32) * 0.02

    # Reference: XLA conv (NCHW, OIHW), then flatten(2).transpose(1,2).
    ref = jax.lax.conv_general_dilated(
        x, weight, window_strides=(P, P), padding="VALID",
        dimension_numbers=("NCHW", "OIHW", "NCHW"))
    ref = ref + bias.reshape(1, E, 1, 1)
    ref = ref.reshape(B, E, -1).transpose(0, 2, 1)

    # f32 path: tight tolerance (exact semantics of the module).
    out_f32 = jax.block_until_ready(
        patch_embedding(x, weight, bias, P, use_bf16=False))
    assert out_f32.shape == (B, (H // P) * (W // P), E)
    assert jnp.allclose(out_f32, ref, atol=1e-4, rtol=1e-4)

    # bf16 MXU path (default): loose tolerance vs f32 reference.
    out_bf16 = jax.block_until_ready(
        patch_embedding(x, weight, bias, P, use_bf16=True))
    assert out_bf16.shape == (B, (H // P) * (W // P), E)
    assert jnp.allclose(out_bf16, ref, atol=2e-2, rtol=2e-2)

    print("KERNEL_OK")
</pallas_src>

<mosaic_0001>
module attributes {stable_mosaic.version = 11 : i64} {
  func.func @_patch_embed_kernel(%arg0: i32, %arg1: memref<32x48xf32, #tpu.memory_space<vmem>>, %arg2: memref<48x32xf32, #tpu.memory_space<vmem>>, %arg3: memref<1x32xf32, #tpu.memory_space<vmem>>, %arg4: memref<32x32xf32, #tpu.memory_space<vmem>>) attributes {dimension_semantics = [#tpu.dimension_semantics<parallel>], iteration_bounds = array<i64: 1>, scalar_prefetch = 0 : i64, scratch_operands = 0 : i64, tpu.core_type = #tpu.core_type<tc>, window_params = [{transform_indices = @transform_0, window_bounds = array<i64: 32, 48>}, {pipeline_mode = #tpu.pipeline_mode<synchronous>, transform_indices = @transform_1, window_bounds = array<i64: 48, 32>}, {pipeline_mode = #tpu.pipeline_mode<synchronous>, transform_indices = @transform_2, window_bounds = array<i64: 1, 32>}, {transform_indices = @transform_3, window_bounds = array<i64: 32, 32>}]} {
    %c0 = arith.constant 0 : index
    %c0_0 = arith.constant 0 : index
    %0 = vector.load %arg1[%c0, %c0_0] : memref<32x48xf32, #tpu.memory_space<vmem>>, vector<32x48xf32>
    %c0_1 = arith.constant 0 : index
    %c0_2 = arith.constant 0 : index
    %1 = vector.load %arg2[%c0_1, %c0_2] : memref<48x32xf32, #tpu.memory_space<vmem>>, vector<48x32xf32>
    %cst = arith.constant dense<0.000000e+00> : vector<32x32xf32>
    %2 = tpu.matmul %0, %1, %cst {dimension_numbers = #tpu.dot_dimension_numbers<[1], [0], [0], [1], [0, 0, 1, 1], [], []>} : vector<32x48xf32>, vector<48x32xf32>, vector<32x32xf32> -> vector<32x32xf32>
    %c0_3 = arith.constant 0 : index
    %c0_4 = arith.constant 0 : index
    %3 = vector.load %arg3[%c0_3, %c0_4] : memref<1x32xf32, #tpu.memory_space<vmem>>, vector<1x32xf32>
    %4 = vector.broadcast %3 : vector<1x32xf32> to vector<32x32xf32>
    %5 = arith.addf %2, %4 : vector<32x32xf32>
    %c0_5 = arith.constant 0 : index
    %c0_6 = arith.constant 0 : index
    %6 = vector.load %arg4[%c0_5, %c0_6] : memref<32x32xf32, #tpu.memory_space<vmem>>, vector<32x32xf32>
    tpu.vector_store %arg4[%c0_5, %c0_6], %5 {strides = array<i32>} : memref<32x32xf32, #tpu.memory_space<vmem>>, vector<32x32xf32>,
    return
  }
  func.func @transform_0(%arg0: i32) -> (i32, i32) {
    %c0_i32 = arith.constant 0 : i32
    %c0_i32_0 = arith.constant 0 : i32
    return %arg0, %c0_i32 : i32, i32
  }
  func.func @transform_1(%arg0: i32) -> (i32, i32) {
    %c0_i32 = arith.constant 0 : i32
    %c0_i32_0 = arith.constant 0 : i32
    %c0_i32_1 = arith.constant 0 : i32
    return %c0_i32, %c0_i32_0 : i32, i32
  }
  func.func @transform_2(%arg0: i32) -> (i32, i32) {
    %c0_i32 = arith.constant 0 : i32
    %c0_i32_0 = arith.constant 0 : i32
    %c0_i32_1 = arith.constant 0 : i32
    return %c0_i32, %c0_i32_0 : i32, i32
  }
  func.func @transform_3(%arg0: i32) -> (i32, i32) {
    %c0_i32 = arith.constant 0 : i32
    %c0_i32_0 = arith.constant 0 : i32
    return %arg0, %c0_i32 : i32, i32
  }
}

</mosaic_0001>

<llo_original>
// kernel: patch_embedding.1
$region0: #{patch_embedding.1}
  #allocation0 [shape = 'u32[]', space=smem, size = 0x4, offset = 0x4, fixed_abs, tag = 'smem constant byte address 0x4 - core index']
  #allocation1 [shape = 'u32[144,128]{1,0:T(1,128)}', space=vmem, size = 0x12000, scoped, tag = 'internal scratch']
  %s0 = inlined_call_operand.vmem [shape: f32[32,48], index: 0, kind: input, shape index: {}]
  %s1 = inlined_call_operand.vmem [shape: f32[48,32], index: 1, kind: input, shape index: {}]
  %s2 = inlined_call_operand.vmem [shape: f32[1,32], index: 2, kind: input, shape index: {}]
  %s3 = inlined_call_operand.hbm [shape: f32[32,32], index: 3, kind: output, shape index: {}]
  %s4 = sld [smem:[#allocation0]]
  $region22: #{patch_embedding.1} parent=0
    _
  %s6 = ssub.s32 1, %s4
  %s7 = scalar_select 0, %s6, %s4
  $region1: #{patch_embedding.1} parent=0
    #allocation2 [shape = 'u8[16384]{0}', space=vmem, size = 0x4000, scoped, tag = 'output window, operand 0, single buffered']
    #allocation3 [shape = 's32[1]{0}', space=sflag, size = 0x4, scoped, tag = 'scoped memory for patch_embedding.1']
    %8 = vsyncpa [#allocation3], 0
    // Predicated region
    $region2: #{patch_embedding.1} parent=1 // pred_check
      _
    $region3: #{patch_embedding.1} parent=1 // pred_check_branch
      %10 = sbr.rel (0) target = $region5
    $region4: #{patch_embedding.1} parent=1 // pred_region
      _
    $region5: #{patch_embedding.1} parent=1 // pred_fallthru
      _
    // Predicated region
    $region6: #{patch_embedding.1} parent=1 // pred_check
      _
    $region7: #{patch_embedding.1} parent=1 // pred_check_branch
      %12 = sbr.rel (0) target = $region9
    $region8: #{patch_embedding.1} parent=1 // pred_region
      _
    $region9: #{patch_embedding.1} parent=1 // pred_fallthru
      _
    // Predicated region
    $region10: #{patch_embedding.1} parent=1 // pred_check
      _
    $region11: #{patch_embedding.1} parent=1 // pred_check_branch
      %14 = sbr.rel (0) target = $region13
    $region12: #{patch_embedding.1} parent=1 // pred_region
      _
    $region13: #{patch_embedding.1} parent=1 // pred_fallthru
      _
    %v15 = vld [vmem:[%s0] sm:$0xff]
    %v16 = vld [vmem:[%s0 + $0x8] sm:$0xff]
    %v17 = vld [vmem:[%s0 + $0x10] sm:$0xff]
    %v18 = vld [vmem:[%s0 + $0x18] sm:$0xff]
    %v19 = vld [vmem:[%s1] sm:$0xff]
    %v20 = vld [vmem:[%s1 + $0x8] sm:$0xff]
    %v21 = vld [vmem:[%s1 + $0x10] sm:$0xff]
    %v22 = vld [vmem:[%s1 + $0x18] sm:$0xff]
    %v23 = vld [vmem:[%s1 + $0x20] sm:$0xff]
    %v24 = vld [vmem:[%s1 + $0x28] sm:$0xff]
    %v25 = vld [vmem:[%s2] sm:$0x1]
    %v27 = vlaneseq
    %v28 = vshrl.u32 %v27, 7
    %v29 = vsub.s32 0, %v28
    %v30 = vrot.slane %v25, %v29
    %vm32 = vcmask 392192
    %v34 = vsel %vm32, %v15, 0
    %v37 = vsel %vm32, %v16, 0
    %v40 = vsel %vm32, %v17, 0
    %v43 = vsel %vm32, %v18, 0
    %45 = vmatprep.subr.mxu0 0.0
    %46 = vmatpush1.msra.mxu0 0.0
    %47 = vmatprep.subr.mxu0 0.0
    %48 = vmatpush1.msra.mxu0 0.0
    %49 = vmatprep.subr.mxu0 0.0
    %50 = vmatpush1.msra.mxu0 0.0
    %51 = vmatprep.subr.mxu0 0.0
    %52 = vmatpush1.msra.mxu0 0.0
    %53 = vmatprep.subr.mxu0 0.0
    %54 = vmatpush1.msra.mxu0 0.0
    %55 = vmatprep.subr.mxu0 0.0
    %56 = vmatpush1.msra.mxu0 0.0
    %57 = vmatprep.subr.mxu0 0.0
    %58 = vmatpush1.msra.mxu0 0.0
    %59 = vmatprep.subr.mxu0 0.0
    %60 = vmatpush1.msra.mxu0 0.0
    %61 = vmatprep.subr.mxu0 0.0
    %62 = vmatpush1.msra.mxu0 0.0
    %63 = vmatprep.subr.mxu0 0.0
    %64 = vmatpush1.msra.mxu0 0.0
    %65 = vmatprep.subr.mxu0 0.0
    %66 = vmatpush1.msra.mxu0 %v24
    %67 = vmatprep.subr.mxu0 0.0
    %68 = vmatpush1.msra.mxu0 %v23
    %69 = vmatprep.subr.mxu0 0.0
    %70 = vmatpush1.msra.mxu0 %v22
    %71 = vmatprep.subr.mxu0 0.0
    %72 = vmatpush1.msra.mxu0 %v21
    %73 = vmatprep.subr.mxu0 0.0
    %74 = vmatpush1.msra.mxu0 %v20
    %75 = vmatprep.subr.mxu0 0.0
    %76 = vmatpush1.msra.mxu0 %v19
    %77 = vmatprep.subr.mxu0 0.0
    %78 = vmatpush2.msra.mxu0 0.0
    %79 = vmatprep.subr.mxu0 0.0
    %80 = vmatpush2.msra.mxu0 0.0
    %81 = vmatprep.subr.mxu0 0.0
    %82 = vmatpush2.msra.mxu0 0.0
    %83 = vmatprep.subr.mxu0 0.0
    %84 = vmatpush2.msra.mxu0 0.0
    %85 = vmatprep.subr.mxu0 0.0
    %86 = vmatpush2.msra.mxu0 0.0
    %87 = vmatprep.subr.mxu0 0.0
    %88 = vmatpush2.msra.mxu0 0.0
    %89 = vmatprep.subr.mxu0 0.0
    %90 = vmatpush2.msra.mxu0 0.0
    %91 = vmatprep.subr.mxu0 0.0
    %92 = vmatpush2.msra.mxu0 0.0
    %93 = vmatprep.subr.mxu0 0.0
    %94 = vmatpush2.msra.mxu0 0.0
    %95 = vmatprep.subr.mxu0 0.0
    %96 = vmatpush2.msra.mxu0 0.0
    %97 = vmatprep.subr.mxu0 0.0
    %98 = vmatpush2.msra.mxu0 0.0
    %99 = vmatprep.subr.mxu0 0.0
    %100 = vmatpush2.msra.mxu0 0.0
    %101 = vmatprep.subr.mxu0 0.0
    %102 = vmatpush2.msra.mxu0 0.0
    %103 = vmatprep.subr.mxu0 0.0
    %104 = vmatpush2.msra.mxu0 0.0
    %105 = vmatprep.subr.mxu0 0.0
    %106 = vmatpush2.msra.mxu0 0.0
    %107 = vmatprep.subr.mxu0 0.0
    %108 = vmatpush2.msra.mxu0 0.0
    %109 = vmatprep.mubr.f32.mxu0 0.0
    %110 = vmatmul.mubr.f32.gmra.mxu0 %v34
    %v111 = vpop.f32.mrf.mxu0
    %v112 = vadd.f32 %v30, %v111
    %v113 = vpop.f32.mrf.mxu0
    %114 = vmatprep.mubr.f32.mxu0 0.0
    %115 = vmatmul.mubr.f32.gmra.mxu0 %v37
    %v116 = vpop.f32.mrf.mxu0
    %v117 = vadd.f32 %v30, %v116
    %v118 = vpop.f32.mrf.mxu0
    %119 = vmatprep.mubr.f32.mxu0 0.0
    %120 = vmatmul.mubr.f32.gmra.mxu0 %v40
    %v121 = vpop.f32.mrf.mxu0
    %v122 = vadd.f32 %v30, %v121
    %v123 = vpop.f32.mrf.mxu0
    %124 = vmatprep.mubr.f32.mxu0 0.0
    %125 = vmatmul.mubr.f32.gmra.mxu0 %v43
    %v126 = vpop.f32.mrf.mxu0
    %v127 = vadd.f32 %v30, %v126
    %v128 = vpop.f32.mrf.mxu0
    %129 = vdwg.mxu0
    %vm130 = vcmask 261120
    %131 = vst.msk [vmem:[#allocation2] sm:$0xff] %vm130, %v112
    %132 = vst.msk [vmem:[#allocation2 + $0x8] sm:$0xff] %vm130, %v117
    %133 = vst.msk [vmem:[#allocation2 + $0x10] sm:$0xff] %vm130, %v122
    %134 = vst.msk [vmem:[#allocation2 + $0x18] sm:$0xff] %vm130, %v127
    // Predicated region
    $region14: #{patch_embedding.1} parent=1 // pred_check
      _
    $region15: #{patch_embedding.1} parent=1 // pred_check_branch
      %136 = sbr.rel (0) target = $region17
    $region16: #{patch_embedding.1} parent=1 // pred_region
      %s138 = ssub.s32 512, 512
      %139 = vsyncadd [#allocation3], %s138
      %s140 = sshll.u32 [#allocation2], 4
      %s141 = int_to_ptr.vmem [resolvable:$true] %s140
      %146 = dma.vmem_to_hbm [thread:$0]  %s141, 512, %s3, [#allocation3], 128, 128, 8
    $region17: #{patch_embedding.1} parent=1 // pred_fallthru
      _
    // Predicated region
    $region18: #{patch_embedding.1} parent=1 // pred_check
      _
    $region19: #{patch_embedding.1} parent=1 // pred_check_branch
      %148 = sbr.rel (0) target = $region21
    $region20: #{patch_embedding.1} parent=1 // pred_region
      %149 = dma.done [#allocation3], 512
    $region21: #{patch_embedding.1} parent=1 // pred_fallthru
      _
    %150 = vsyncpa [#allocation3], 1

</llo_original>
